<compile_context>
chip_gen: v7x
topology: tpu7x:2x2x1
jax: 0.10.0
libtpu: 0.0.40
codegen_flags: <defaults>
</compile_context>

<pallas_src>
import functools

import jax
import jax.numpy as jnp
from jax.experimental import pallas as pl
from jax.experimental.pallas import tpu as pltpu

HID, OUT = 220, 110       # true fc1 / fc2 output dims (PyTorch module)
HID_PAD = 256             # lane-dense padded hidden dim used inside the kernel


def _round_up(x, m):
    return ((x + m - 1) // m) * m


def _siamese_kernel(a_ref, x1_ref, x2_ref, w1t_ref, b1_ref, w2t_ref, b2_ref,
                    o1_ref, o2_ref):
    """fc2(PReLU(fc1(x))) for both Siamese branches on one batch tile.

    Weights/biases are VMEM-resident (constant index_map) so both branches run
    against the same tiles with zero extra weight DMA.
    """
    a = a_ref[0]                    # PReLU slope (scalar, SMEM)
    w1t = w1t_ref[...]              # (in, 256)  bf16
    b1 = b1_ref[...]                # (1, 256)   f32
    w2t = w2t_ref[...]              # (256, 110) bf16
    b2 = b2_ref[...]                # (1, 110)   f32

    def branch(x_ref, o_ref):
        x = x_ref[...].astype(jnp.bfloat16)     # no-op if input already bf16
        # fc1: (tb, in) @ (in, 256) on the MXU, f32 accumulation, + bias (f32)
        h = jnp.dot(x, w1t, preferred_element_type=jnp.float32) + b1
        # PReLU with a single shared slope (PyTorch default num_parameters=1)
        h = jnp.where(h >= 0.0, h, a * h)
        # dropout(p=0.1) is identity at inference time.
        # TODO(synk): training-mode dropout (stochastic masking) not implemented.
        # fc2: (tb, 256) @ (256, 110) + bias; padded hidden rows/cols are zero.
        o = jnp.dot(h.astype(jnp.bfloat16), w2t,
                    preferred_element_type=jnp.float32) + b2
        o_ref[...] = o.astype(o_ref.dtype)

    branch(x1_ref, o1_ref)
    branch(x2_ref, o2_ref)


def _pick_batch_tile(B, tile_b_max):
    """Batch tile: full batch when tiny; otherwise a multiple of 16 (bf16-safe
    sublane packing) that minimizes padding and yields >=2 grid steps so the
    'parallel' grid axis can be sharded across v7x's 2 TensorCores."""
    if B < 32:
        return B                                  # single block == full array dim
    n_tiles = max(pl.cdiv(B, tile_b_max), 2)
    return _round_up(pl.cdiv(B, n_tiles), 16)


@functools.partial(jax.jit, static_argnames=("tile_b", "out_dtype"))
def siamese_forward(x1, x2, dev, *, tile_b=2048, out_dtype=jnp.bfloat16):
    """dev: pre-laid-out params from make_siamese_params (w1t, b1, w2t, b2, a)."""
    B, inputsize = x1.shape
    tb = _pick_batch_tile(B, tile_b)
    grid = (pl.cdiv(B, tb),)

    flops = 4 * B * (inputsize * HID_PAD + HID_PAD * OUT)
    bytes_accessed = (
        B * inputsize * (x1.dtype.itemsize + x2.dtype.itemsize)      # inputs
        + dev["w1t"].size * dev["w1t"].dtype.itemsize                # weights
        + dev["w2t"].size * dev["w2t"].dtype.itemsize
        + (dev["b1"].size + dev["b2"].size) * 4                      # biases
        + 2 * B * OUT * jnp.dtype(out_dtype).itemsize                # outputs
    )

    o1, o2 = pl.pallas_call(
        _siamese_kernel,
        out_shape=(jax.ShapeDtypeStruct((B, OUT), out_dtype),
                   jax.ShapeDtypeStruct((B, OUT), out_dtype)),
        grid=grid,
        in_specs=[
            # PReLU slope: scalar in SMEM (no padded VMEM tile / vld slot burned)
            pl.BlockSpec(memory_space=pltpu.MemorySpace.SMEM),
            # activations: tiled over the batch axis, one tile per branch
            pl.BlockSpec((tb, inputsize), lambda i: (i, 0)),
            pl.BlockSpec((tb, inputsize), lambda i: (i, 0)),
            # weights / biases: constant index_map -> VMEM-resident across steps
            pl.BlockSpec((inputsize, HID_PAD), lambda i: (0, 0)),
            pl.BlockSpec((1, HID_PAD), lambda i: (0, 0)),
            pl.BlockSpec((HID_PAD, OUT), lambda i: (0, 0)),
            pl.BlockSpec((1, OUT), lambda i: (0, 0)),
        ],
        out_specs=(
            pl.BlockSpec((tb, OUT), lambda i: (i, 0)),
            pl.BlockSpec((tb, OUT), lambda i: (i, 0)),
        ),
        compiler_params=pltpu.CompilerParams(
            dimension_semantics=("parallel",)),   # shard batch tiles across TCs
        cost_estimate=pl.CostEstimate(
            flops=flops, transcendentals=0, bytes_accessed=bytes_accessed),
    )(dev["a"], x1, x2, dev["w1t"], dev["b1"], dev["w2t"], dev["b2"])

    return o1, o2


def make_siamese_params(key, inputsize, weight_dtype=jnp.bfloat16):
    """nn.Linear-style init (U(+/-1/sqrt(fan_in))), plus one-time kernel layout:
    transpose, zero-pad hidden 220->256, cast weights to bf16."""
    k1, k2, k3, k4 = jax.random.split(key, 4)
    lim1 = 1.0 / jnp.sqrt(jnp.float32(inputsize))
    lim2 = 1.0 / jnp.sqrt(jnp.float32(HID))
    raw = {
        "w1": jax.random.uniform(k1, (HID, inputsize), jnp.float32, -lim1, lim1),
        "b1": jax.random.uniform(k2, (HID,), jnp.float32, -lim1, lim1),
        "w2": jax.random.uniform(k3, (OUT, HID), jnp.float32, -lim2, lim2),
        "b2": jax.random.uniform(k4, (OUT,), jnp.float32, -lim2, lim2),
        "a": jnp.float32(0.25),        # PReLU default slope
    }
    dev = {
        "w1t": jnp.zeros((inputsize, HID_PAD), weight_dtype)
                  .at[:, :HID].set(raw["w1"].T.astype(weight_dtype)),
        "b1": jnp.zeros((1, HID_PAD), jnp.float32).at[:, :HID].set(raw["b1"]),
        "w2t": jnp.zeros((HID_PAD, OUT), weight_dtype)
                  .at[:HID, :].set(raw["w2"].T.astype(weight_dtype)),
        "b2": raw["b2"].reshape(1, OUT),
        "a": raw["a"].reshape(1),
    }
    return raw, dev


def reference_forward(x1, x2, p):
    """Pure-JAX f32 reference of the PyTorch module (eval mode)."""
    hp = jax.lax.Precision.HIGHEST

    def once(x):
        h = jnp.dot(x, p["w1"].T, precision=hp) + p["b1"]
        h = jnp.where(h >= 0, h, p["a"] * h)
        return jnp.dot(h, p["w2"].T, precision=hp) + p["b2"]

    return once(x1), once(x2)


if __name__ == "__main__":
    key = jax.random.PRNGKey(0)
    kx1, kx2, kp = jax.random.split(key, 3)

    inputsize = 32   # consistent with fc1(inputsize, 220)
    batch = 2

    # Activations stored bf16 "upstream" -> half the input DMA bytes in-kernel.
    x1 = jax.random.normal(kx1, (batch, inputsize), jnp.float32).astype(jnp.bfloat16)
    x2 = jax.random.normal(kx2, (batch, inputsize), jnp.float32).astype(jnp.bfloat16)
    raw_params, dev_params = make_siamese_params(kp, inputsize)

    o1, o2 = siamese_forward(x1, x2, dev_params)
    jax.block_until_ready((o1, o2))

    # Reference runs in f32 on the same (bf16-valued) inputs.
    r1, r2 = reference_forward(x1.astype(jnp.float32), x2.astype(jnp.float32),
                               raw_params)
    assert o1.shape == (batch, OUT) and o2.shape == (batch, OUT)
    o1f, o2f = o1.astype(jnp.float32), o2.astype(jnp.float32)
    # tolerance covers bf16 weight/activation/output rounding (errors ~1e-3..1e-2)
    assert jnp.allclose(o1f, r1, atol=2e-2, rtol=2e-2), "branch-1 mismatch vs reference"
    assert jnp.allclose(o2f, r2, atol=2e-2, rtol=2e-2), "branch-2 mismatch vs reference"

    print("KERNEL_OK")
</pallas_src>

<mosaic_0001>
module attributes {stable_mosaic.version = 11 : i64} {
  func.func @_siamese_kernel(%arg0: i32, %arg1: memref<1xf32, #tpu.memory_space<smem>>, %arg2: memref<2x32xbf16, #tpu.memory_space<vmem>>, %arg3: memref<2x32xbf16, #tpu.memory_space<vmem>>, %arg4: memref<32x256xbf16, #tpu.memory_space<vmem>>, %arg5: memref<1x256xf32, #tpu.memory_space<vmem>>, %arg6: memref<256x110xbf16, #tpu.memory_space<vmem>>, %arg7: memref<1x110xf32, #tpu.memory_space<vmem>>, %arg8: memref<2x110xbf16, #tpu.memory_space<vmem>>, %arg9: memref<2x110xbf16, #tpu.memory_space<vmem>>) attributes {dimension_semantics = [#tpu.dimension_semantics<parallel>], iteration_bounds = array<i64: 1>, scalar_prefetch = 0 : i64, scratch_operands = 0 : i64, tpu.core_type = #tpu.core_type<tc>, window_params = [{transform_indices = @transform_0, window_bounds = array<i64: 1>}, {transform_indices = @transform_1, window_bounds = array<i64: 2, 32>}, {transform_indices = @transform_2, window_bounds = array<i64: 2, 32>}, {pipeline_mode = #tpu.pipeline_mode<synchronous>, transform_indices = @transform_3, window_bounds = array<i64: 32, 256>}, {pipeline_mode = #tpu.pipeline_mode<synchronous>, transform_indices = @transform_4, window_bounds = array<i64: 1, 256>}, {pipeline_mode = #tpu.pipeline_mode<synchronous>, transform_indices = @transform_5, window_bounds = array<i64: 256, 110>}, {pipeline_mode = #tpu.pipeline_mode<synchronous>, transform_indices = @transform_6, window_bounds = array<i64: 1, 110>}, {transform_indices = @transform_7, window_bounds = array<i64: 2, 110>}, {transform_indices = @transform_8, window_bounds = array<i64: 2, 110>}]} {
    %c0 = arith.constant 0 : index
    %0 = memref.load %arg1[%c0] : memref<1xf32, #tpu.memory_space<smem>>
    %c0_0 = arith.constant 0 : index
    %c0_1 = arith.constant 0 : index
    %1 = vector.load %arg4[%c0_0, %c0_1] : memref<32x256xbf16, #tpu.memory_space<vmem>>, vector<32x256xbf16>
    %c0_2 = arith.constant 0 : index
    %c0_3 = arith.constant 0 : index
    %2 = vector.load %arg5[%c0_2, %c0_3] : memref<1x256xf32, #tpu.memory_space<vmem>>, vector<1x256xf32>
    %c0_4 = arith.constant 0 : index
    %c0_5 = arith.constant 0 : index
    %3 = vector.load %arg6[%c0_4, %c0_5] : memref<256x110xbf16, #tpu.memory_space<vmem>>, vector<256x110xbf16>
    %c0_6 = arith.constant 0 : index
    %c0_7 = arith.constant 0 : index
    %4 = vector.load %arg7[%c0_6, %c0_7] : memref<1x110xf32, #tpu.memory_space<vmem>>, vector<1x110xf32>
    %c0_8 = arith.constant 0 : index
    %c0_9 = arith.constant 0 : index
    %5 = vector.load %arg2[%c0_8, %c0_9] : memref<2x32xbf16, #tpu.memory_space<vmem>>, vector<2x32xbf16>
    %cst = arith.constant dense<0.000000e+00> : vector<2x256xf32>
    %6 = tpu.matmul %5, %1, %cst {dimension_numbers = #tpu.dot_dimension_numbers<[1], [0], [0], [1], [0, 0, 1, 1], [], []>} : vector<2x32xbf16>, vector<32x256xbf16>, vector<2x256xf32> -> vector<2x256xf32>
    %7 = vector.broadcast %2 : vector<1x256xf32> to vector<2x256xf32>
    %8 = arith.addf %6, %7 : vector<2x256xf32>
    %cst_10 = arith.constant 0.000000e+00 : f32
    %9 = vector.broadcast %cst_10 : f32 to vector<2x256xf32>
    %10 = arith.cmpf oge, %8, %9 : vector<2x256xf32>
    %11 = vector.broadcast %0 : f32 to vector<2x256xf32>
    %12 = arith.mulf %11, %8 : vector<2x256xf32>
    %13 = arith.select %10, %8, %12 : vector<2x256xi1>, vector<2x256xf32>
    %14 = arith.truncf %13 : vector<2x256xf32> to vector<2x256xbf16>
    %cst_11 = arith.constant dense<0.000000e+00> : vector<2x110xf32>
    %15 = tpu.matmul %14, %3, %cst_11 {dimension_numbers = #tpu.dot_dimension_numbers<[1], [0], [0], [1], [0, 0, 1, 1], [], []>} : vector<2x256xbf16>, vector<256x110xbf16>, vector<2x110xf32> -> vector<2x110xf32>
    %16 = vector.broadcast %4 : vector<1x110xf32> to vector<2x110xf32>
    %17 = arith.addf %15, %16 : vector<2x110xf32>
    %18 = arith.truncf %17 : vector<2x110xf32> to vector<2x110xbf16>
    %c0_12 = arith.constant 0 : index
    %c0_13 = arith.constant 0 : index
    %19 = vector.load %arg8[%c0_12, %c0_13] : memref<2x110xbf16, #tpu.memory_space<vmem>>, vector<2x110xbf16>
    tpu.vector_store %arg8[%c0_12, %c0_13], %18 {strides = array<i32>} : memref<2x110xbf16, #tpu.memory_space<vmem>>, vector<2x110xbf16>,
    %c0_14 = arith.constant 0 : index
    %c0_15 = arith.constant 0 : index
    %20 = vector.load %arg3[%c0_14, %c0_15] : memref<2x32xbf16, #tpu.memory_space<vmem>>, vector<2x32xbf16>
    %cst_16 = arith.constant dense<0.000000e+00> : vector<2x256xf32>
    %21 = tpu.matmul %20, %1, %cst_16 {dimension_numbers = #tpu.dot_dimension_numbers<[1], [0], [0], [1], [0, 0, 1, 1], [], []>} : vector<2x32xbf16>, vector<32x256xbf16>, vector<2x256xf32> -> vector<2x256xf32>
    %22 = vector.broadcast %2 : vector<1x256xf32> to vector<2x256xf32>
    %23 = arith.addf %21, %22 : vector<2x256xf32>
    %cst_17 = arith.constant 0.000000e+00 : f32
    %24 = vector.broadcast %cst_17 : f32 to vector<2x256xf32>
    %25 = arith.cmpf oge, %23, %24 : vector<2x256xf32>
    %26 = vector.broadcast %0 : f32 to vector<2x256xf32>
    %27 = arith.mulf %26, %23 : vector<2x256xf32>
    %28 = arith.select %25, %23, %27 : vector<2x256xi1>, vector<2x256xf32>
    %29 = arith.truncf %28 : vector<2x256xf32> to vector<2x256xbf16>
    %cst_18 = arith.constant dense<0.000000e+00> : vector<2x110xf32>
    %30 = tpu.matmul %29, %3, %cst_18 {dimension_numbers = #tpu.dot_dimension_numbers<[1], [0], [0], [1], [0, 0, 1, 1], [], []>} : vector<2x256xbf16>, vector<256x110xbf16>, vector<2x110xf32> -> vector<2x110xf32>
    %31 = vector.broadcast %4 : vector<1x110xf32> to vector<2x110xf32>
    %32 = arith.addf %30, %31 : vector<2x110xf32>
    %33 = arith.truncf %32 : vector<2x110xf32> to vector<2x110xbf16>
    %c0_19 = arith.constant 0 : index
    %c0_20 = arith.constant 0 : index
    %34 = vector.load %arg9[%c0_19, %c0_20] : memref<2x110xbf16, #tpu.memory_space<vmem>>, vector<2x110xbf16>
    tpu.vector_store %arg9[%c0_19, %c0_20], %33 {strides = array<i32>} : memref<2x110xbf16, #tpu.memory_space<vmem>>, vector<2x110xbf16>,
    return
  }
  func.func @transform_0(%arg0: i32) -> i32 {
    %c0_i32 = arith.constant 0 : i32
    %c0_i32_0 = arith.constant 0 : i32
    return %c0_i32 : i32
  }
  func.func @transform_1(%arg0: i32) -> (i32, i32) {
    %c0_i32 = arith.constant 0 : i32
    %c0_i32_0 = arith.constant 0 : i32
    return %arg0, %c0_i32 : i32, i32
  }
  func.func @transform_2(%arg0: i32) -> (i32, i32) {
    %c0_i32 = arith.constant 0 : i32
    %c0_i32_0 = arith.constant 0 : i32
    return %arg0, %c0_i32 : i32, i32
  }
  func.func @transform_3(%arg0: i32) -> (i32, i32) {
    %c0_i32 = arith.constant 0 : i32
    %c0_i32_0 = arith.constant 0 : i32
    %c0_i32_1 = arith.constant 0 : i32
    return %c0_i32, %c0_i32_0 : i32, i32
  }
  func.func @transform_4(%arg0: i32) -> (i32, i32) {
    %c0_i32 = arith.constant 0 : i32
    %c0_i32_0 = arith.constant 0 : i32
    %c0_i32_1 = arith.constant 0 : i32
    return %c0_i32, %c0_i32_0 : i32, i32
  }
  func.func @transform_5(%arg0: i32) -> (i32, i32) {
    %c0_i32 = arith.constant 0 : i32
    %c0_i32_0 = arith.constant 0 : i32
    %c0_i32_1 = arith.constant 0 : i32
    return %c0_i32, %c0_i32_0 : i32, i32
  }
  func.func @transform_6(%arg0: i32) -> (i32, i32) {
    %c0_i32 = arith.constant 0 : i32
    %c0_i32_0 = arith.constant 0 : i32
    %c0_i32_1 = arith.constant 0 : i32
    return %c0_i32, %c0_i32_0 : i32, i32
  }
  func.func @transform_7(%arg0: i32) -> (i32, i32) {
    %c0_i32 = arith.constant 0 : i32
    %c0_i32_0 = arith.constant 0 : i32
    return %arg0, %c0_i32 : i32, i32
  }
  func.func @transform_8(%arg0: i32) -> (i32, i32) {
    %c0_i32 = arith.constant 0 : i32
    %c0_i32_0 = arith.constant 0 : i32
    return %arg0, %c0_i32 : i32, i32
  }
}

</mosaic_0001>

<llo_original>
// kernel: siamese_forward.1
$region0: #{siamese_forward.1}
  #allocation0 [shape = 'u32[]', space=smem, size = 0x4, offset = 0x4, fixed_abs, tag = 'smem constant byte address 0x4 - core index']
  #allocation1 [shape = 'u32[144,128]{1,0:T(1,128)}', space=vmem, size = 0x12000, scoped, tag = 'internal scratch']
  #allocation2 [shape = 'f32[1]{0:T(128)S(6)}', space=smem, size = 0x200, scoped, tag = 'scoped memory for siamese_forward.1']
  %s0 = inlined_call_operand.<no memory space> [shape: f32[1], index: 0, kind: input, shape index: {}]
  %s1 = inlined_call_operand.vmem [shape: bf16[2,32], index: 1, kind: input, shape index: {}]
  %s2 = inlined_call_operand.vmem [shape: bf16[2,32], index: 2, kind: input, shape index: {}]
  %s3 = inlined_call_operand.vmem [shape: bf16[32,256], index: 3, kind: input, shape index: {}]
  %s4 = inlined_call_operand.vmem [shape: f32[1,256], index: 4, kind: input, shape index: {}]
  %s5 = inlined_call_operand.vmem [shape: bf16[256,110], index: 5, kind: input, shape index: {}]
  %s6 = inlined_call_operand.vmem [shape: f32[1,110], index: 6, kind: input, shape index: {}]
  %s7 = inlined_call_operand.hbm [shape: bf16[2,110], index: 7, kind: output, shape index: {0}]
  %s8 = inlined_call_operand.hbm [shape: bf16[2,110], index: 8, kind: output, shape index: {1}]
  %9 = xla_tuple %s7, %s8
  %s10 = sld [smem:[#allocation0]]
  $region46: #{siamese_forward.1} parent=0
    _
  %s12 = ssub.s32 1, %s10
  %s13 = scalar_select 0, %s12, %s10
  %14 = sst [smem:[#allocation2]] %s0
  $region1: #{siamese_forward.1} parent=0
    #allocation3 [shape = 'u8[512]{0}', space=vmem, size = 0x400, scoped, tag = 'output window, operand 0, single buffered']
    #allocation4 [shape = 's32[1]{0}', space=sflag, size = 0x4, scoped, tag = 'scoped memory for siamese_forward.1']
    #allocation5 [shape = 'u8[512]{0}', space=vmem, size = 0x400, scoped, tag = 'output window, operand 1, single buffered']
    #allocation6 [shape = 's32[1]{0}', space=sflag, size = 0x4, scoped, tag = 'scoped memory for siamese_forward.1']
    %15 = vsyncpa [#allocation4], 0
    %16 = vsyncpa [#allocation6], 0
    // Predicated region
    $region2: #{siamese_forward.1} parent=1 // pred_check
      _
    $region3: #{siamese_forward.1} parent=1 // pred_check_branch
      %18 = sbr.rel (0) target = $region5
    $region4: #{siamese_forward.1} parent=1 // pred_region
      _
    $region5: #{siamese_forward.1} parent=1 // pred_fallthru
      _
    // Predicated region
    $region6: #{siamese_forward.1} parent=1 // pred_check
      _
    $region7: #{siamese_forward.1} parent=1 // pred_check_branch
      %20 = sbr.rel (0) target = $region9
    $region8: #{siamese_forward.1} parent=1 // pred_region
      _
    $region9: #{siamese_forward.1} parent=1 // pred_fallthru
      _
    // Predicated region
    $region10: #{siamese_forward.1} parent=1 // pred_check
      _
    $region11: #{siamese_forward.1} parent=1 // pred_check_branch
      %22 = sbr.rel (0) target = $region13
    $region12: #{siamese_forward.1} parent=1 // pred_region
      _
    $region13: #{siamese_forward.1} parent=1 // pred_fallthru
      _
    // Predicated region
    $region14: #{siamese_forward.1} parent=1 // pred_check
      _
    $region15: #{siamese_forward.1} parent=1 // pred_check_branch
      %24 = sbr.rel (0) target = $region17
    $region16: #{siamese_forward.1} parent=1 // pred_region
      _
    $region17: #{siamese_forward.1} parent=1 // pred_fallthru
      _
    // Predicated region
    $region18: #{siamese_forward.1} parent=1 // pred_check
      _
    $region19: #{siamese_forward.1} parent=1 // pred_check_branch
      %26 = sbr.rel (0) target = $region21
    $region20: #{siamese_forward.1} parent=1 // pred_region
      _
    $region21: #{siamese_forward.1} parent=1 // pred_fallthru
      _
    // Predicated region
    $region22: #{siamese_forward.1} parent=1 // pred_check
      _
    $region23: #{siamese_forward.1} parent=1 // pred_check_branch
      %28 = sbr.rel (0) target = $region25
    $region24: #{siamese_forward.1} parent=1 // pred_region
      _
    $region25: #{siamese_forward.1} parent=1 // pred_fallthru
      _
    // Predicated region
    $region26: #{siamese_forward.1} parent=1 // pred_check
      _
    $region27: #{siamese_forward.1} parent=1 // pred_check_branch
      %30 = sbr.rel (0) target = $region29
    $region28: #{siamese_forward.1} parent=1 // pred_region
      _
    $region29: #{siamese_forward.1} parent=1 // pred_fallthru
      _
    %s32 = sld [smem:[#allocation2]]
    %v33 = vld [vmem:[%s3] sm:$0xff]
    %v34 = vld [vmem:[%s3 + $0x8] sm:$0xff]
    %v35 = vld [vmem:[%s3 + $0x10] sm:$0xff]
    %v36 = vld [vmem:[%s3 + $0x18] sm:$0xff]
    %v37 = vld [vmem:[%s4] sm:$0x3]
    %v38 = vld [vmem:[%s5] sm:$0xf]
    %v39 = vld [vmem:[%s5 + $0x4] sm:$0xf]
    %v40 = vld [vmem:[%s5 + $0x8] sm:$0xf]
    %v41 = vld [vmem:[%s5 + $0xc] sm:$0xf]
    %v42 = vld [vmem:[%s5 + $0x10] sm:$0xf]
    %v43 = vld [vmem:[%s5 + $0x14] sm:$0xf]
    %v44 = vld [vmem:[%s5 + $0x18] sm:$0xf]
    %v45 = vld [vmem:[%s5 + $0x1c] sm:$0xf]
    %v46 = vld [vmem:[%s5 + $0x20] sm:$0xf]
    %v47 = vld [vmem:[%s5 + $0x24] sm:$0xf]
    %v48 = vld [vmem:[%s5 + $0x28] sm:$0xf]
    %v49 = vld [vmem:[%s5 + $0x2c] sm:$0xf]
    %v50 = vld [vmem:[%s5 + $0x30] sm:$0xf]
    %v51 = vld [vmem:[%s5 + $0x34] sm:$0xf]
    %v52 = vld [vmem:[%s5 + $0x38] sm:$0xf]
    %v53 = vld [vmem:[%s5 + $0x3c] sm:$0xf]
    %v54 = vld [vmem:[%s5 + $0x40] sm:$0xf]
    %v55 = vld [vmem:[%s5 + $0x44] sm:$0xf]
    %v56 = vld [vmem:[%s5 + $0x48] sm:$0xf]
    %v57 = vld [vmem:[%s5 + $0x4c] sm:$0xf]
    %v58 = vld [vmem:[%s5 + $0x50] sm:$0xf]
    %v59 = vld [vmem:[%s5 + $0x54] sm:$0xf]
    %v60 = vld [vmem:[%s5 + $0x58] sm:$0xf]
    %v61 = vld [vmem:[%s5 + $0x5c] sm:$0xf]
    %v62 = vld [vmem:[%s5 + $0x60] sm:$0xf]
    %v63 = vld [vmem:[%s5 + $0x64] sm:$0xf]
    %v64 = vld [vmem:[%s5 + $0x68] sm:$0xf]
    %v65 = vld [vmem:[%s5 + $0x6c] sm:$0xf]
    %v66 = vld [vmem:[%s5 + $0x70] sm:$0xf]
    %v67 = vld [vmem:[%s5 + $0x74] sm:$0xf]
    %v68 = vld [vmem:[%s5 + $0x78] sm:$0xf]
    %v69 = vld [vmem:[%s5 + $0x7c] sm:$0xf]
    %v70 = vld [vmem:[%s6] sm:$0x1]
    %v71 = vld [vmem:[%s1] sm:$0x1]
    %v73 = vlaneseq
    %v74 = vshrl.u32 %v73, 7
    %v75 = vsub.s32 0, %v74
    %v76 = vrot.slane %v37, %v75
    %v77 = vlaneseq
    %v78 = vshrl.u32 %v77, 7
    %v79 = vsub.s32 1, %v78
    %v80 = vrot.slane %v37, %v79
    %v87 = vunpack.c.l.b16 %v33
    %v88 = vunpack.c.h.b16 %v33
    %v89 = vunpack.c.l.b16 %v34
    %v90 = vunpack.c.h.b16 %v34
    %v91 = vunpack.c.l.b16 %v35
    %v92 = vunpack.c.h.b16 %v35
    %v93 = vunpack.c.l.b16 %v36
    %v94 = vunpack.c.h.b16 %v36
    %v95 = vpack.c.b16 %v89, %v87
    %v96 = vpack.c.b16 %v90, %v88
    %v97 = vpack.c.b16 %v93, %v91
    %v98 = vpack.c.b16 %v94, %v92
    %vm103 = vcmask 261120
    %v105 = vsel %vm103, %v71, 0
    %107 = vmatprep.subr.bf16.mxu0 %v96
    %108 = vmatpush1.bf16.msra.mxu0 %v95
    %109 = vmatprep.subr.bf16.mxu0 %v98
    %110 = vmatpush1.bf16.msra.mxu0 %v97
    %111 = vmatprep.subr.bf16.mxu0 0
    %112 = vmatpush1.bf16.msra.mxu0 0
    %113 = vmatprep.subr.bf16.mxu0 0
    %114 = vmatpush1.bf16.msra.mxu0 0
    %115 = vmatprep.subr.bf16.mxu0 0
    %116 = vmatpush1.bf16.msra.mxu0 0
    %117 = vmatprep.subr.bf16.mxu0 0
    %118 = vmatpush1.bf16.msra.mxu0 0
    %119 = vmatprep.subr.bf16.mxu0 0
    %120 = vmatpush1.bf16.msra.mxu0 0
    %121 = vmatprep.subr.bf16.mxu0 0
    %122 = vmatpush1.bf16.msra.mxu0 0
    %123 = vmatprep.subr.bf16.mxu0 0
    %124 = vmatpush1.bf16.msra.mxu0 0
    %125 = vmatprep.subr.bf16.mxu0 0
    %126 = vmatpush1.bf16.msra.mxu0 0
    %127 = vmatprep.subr.bf16.mxu0 0
    %128 = vmatpush1.bf16.msra.mxu0 0
    %129 = vmatprep.subr.bf16.mxu0 0
    %130 = vmatpush1.bf16.msra.mxu0 0
    %131 = vmatprep.subr.bf16.mxu0 0
    %132 = vmatpush1.bf16.msra.mxu0 0
    %133 = vmatprep.subr.bf16.mxu0 0
    %134 = vmatpush1.bf16.msra.mxu0 0
    %135 = vmatprep.subr.bf16.mxu0 0
    %136 = vmatpush1.bf16.msra.mxu0 0
    %137 = vmatprep.subr.bf16.mxu0 0
    %138 = vmatpush1.bf16.msra.mxu0 0
    %139 = vmatprep.mubr.bf16.mxu0 0
    %140 = vmatmul.mubr.bf16.gmra.mrb[0].mxu0 %v105
    %v141 = vpop.f32.mrb[0].mxu0
    %v142 = vadd.f32 %v76, %v141
    %v143 = vpop.f32.mrb[0].mxu0
    %v144 = vadd.f32 %v80, %v143
    %v145 = vpop.f32.mrb[0].mxu0
    %v146 = vpop.f32.mrb[0].mxu0
    %147 = vdwg.mxu0
    %vm148 = vcmp.ge.f32.partialorder %v142, 0.0
    %vm149 = vcmp.ge.f32.partialorder %v144, 0.0
    %v150 = vstv %s32
    %v151 = vmul.f32 %v150, %v142
    %v152 = vmul.f32 %v150, %v144
    %v153 = vsel %vm148, %v142, %v151
    %v154 = vsel %vm149, %v144, %v152
    %v155 = vpack.c.bf16 %v153, %v153
    %v156 = vpack.c.bf16 %v154, %v154
    %v158 = vlaneseq
    %v159 = vshrl.u32 %v158, 7
    %v160 = vsub.s32 0, %v159
    %v161 = vrot.slane %v70, %v160
    %v195 = vunpack.c.l.b16 %v38
    %v196 = vunpack.c.l.b16 %v39
    %v197 = vunpack.c.l.b16 %v40
    %v198 = vunpack.c.l.b16 %v41
    %v199 = vunpack.c.l.b16 %v42
    %v200 = vunpack.c.l.b16 %v43
    %v201 = vunpack.c.l.b16 %v44
    %v202 = vunpack.c.l.b16 %v45
    %v203 = vunpack.c.l.b16 %v46
    %v204 = vunpack.c.l.b16 %v47
    %v205 = vunpack.c.l.b16 %v48
    %v206 = vunpack.c.l.b16 %v49
    %v207 = vunpack.c.l.b16 %v50
    %v208 = vunpack.c.l.b16 %v51
    %v209 = vunpack.c.l.b16 %v52
    %v210 = vunpack.c.l.b16 %v53
    %v211 = vunpack.c.l.b16 %v54
    %v212 = vunpack.c.l.b16 %v55
    %v213 = vunpack.c.l.b16 %v56
    %v214 = vunpack.c.l.b16 %v57
    %v215 = vunpack.c.l.b16 %v58
    %v216 = vunpack.c.l.b16 %v59
    %v217 = vunpack.c.l.b16 %v60
    %v218 = vunpack.c.l.b16 %v61
    %v219 = vunpack.c.l.b16 %v62
    %v220 = vunpack.c.l.b16 %v63
    %v221 = vunpack.c.l.b16 %v64
    %v222 = vunpack.c.l.b16 %v65
    %v223 = vunpack.c.l.b16 %v66
    %v224 = vunpack.c.l.b16 %v67
    %v225 = vunpack.c.l.b16 %v68
    %v226 = vunpack.c.l.b16 %v69
    %v227 = vpack.c.b16 %v196, %v195
    %v228 = vpack.c.b16 %v198, %v197
    %v229 = vpack.c.b16 %v200, %v199
    %v230 = vpack.c.b16 %v202, %v201
    %v231 = vpack.c.b16 %v204, %v203
    %v232 = vpack.c.b16 %v206, %v205
    %v233 = vpack.c.b16 %v208, %v207
    %v234 = vpack.c.b16 %v210, %v209
    %v235 = vpack.c.b16 %v212, %v211
    %v236 = vpack.c.b16 %v214, %v213
    %v237 = vpack.c.b16 %v216, %v215
    %v238 = vpack.c.b16 %v218, %v217
    %v239 = vpack.c.b16 %v220, %v219
    %v240 = vpack.c.b16 %v222, %v221
    %v241 = vpack.c.b16 %v224, %v223
    %v242 = vpack.c.b16 %v226, %v225
    %259 = vmatprep.subr.bf16.mxu0 0
    %260 = vmatpush1.bf16.msra.mxu0 %v227
    %261 = vmatprep.subr.bf16.mxu0 0
    %262 = vmatpush1.bf16.msra.mxu0 %v228
    %263 = vmatprep.subr.bf16.mxu0 0
    %264 = vmatpush1.bf16.msra.mxu0 %v229
    %265 = vmatprep.subr.bf16.mxu0 0
    %266 = vmatpush1.bf16.msra.mxu0 %v230
    %267 = vmatprep.subr.bf16.mxu0 0
    %268 = vmatpush1.bf16.msra.mxu0 %v231
    %269 = vmatprep.subr.bf16.mxu0 0
    %270 = vmatpush1.bf16.msra.mxu0 %v232
    %271 = vmatprep.subr.bf16.mxu0 0
    %272 = vmatpush1.bf16.msra.mxu0 %v233
    %273 = vmatprep.subr.bf16.mxu0 0
    %274 = vmatpush1.bf16.msra.mxu0 %v234
    %275 = vmatprep.subr.bf16.mxu0 0
    %276 = vmatpush1.bf16.msra.mxu0 %v235
    %277 = vmatprep.subr.bf16.mxu0 0
    %278 = vmatpush1.bf16.msra.mxu0 %v236
    %279 = vmatprep.subr.bf16.mxu0 0
    %280 = vmatpush1.bf16.msra.mxu0 %v237
    %281 = vmatprep.subr.bf16.mxu0 0
    %282 = vmatpush1.bf16.msra.mxu0 %v238
    %283 = vmatprep.subr.bf16.mxu0 0
    %284 = vmatpush1.bf16.msra.mxu0 %v239
    %285 = vmatprep.subr.bf16.mxu0 0
    %286 = vmatpush1.bf16.msra.mxu0 %v240
    %287 = vmatprep.subr.bf16.mxu0 0
    %288 = vmatpush1.bf16.msra.mxu0 %v241
    %289 = vmatprep.subr.bf16.mxu0 0
    %290 = vmatpush1.bf16.msra.mxu0 %v242
    %291 = vmatprep.mubr.bf16.mxu0 %v156
    %292 = vmatmul.mubr.bf16.gmra.mrb[0].mxu0 %v155
    %v293 = vpop.f32.mrb[0].mxu0
    %v294 = vadd.f32 %v161, %v293
    %v295 = vpop.f32.mrb[0].mxu0
    %v296 = vpop.f32.mrb[0].mxu0
    %v297 = vpop.f32.mrb[0].mxu0
    %298 = vdwg.mxu0
    %v299 = vpack.c.bf16 %v294, %v294
    %vm300 = vcmask 892928
    %301 = vst.msk [vmem:[#allocation3] sm:$0x1] %vm300, %v299
    %v302 = vld [vmem:[%s2] sm:$0x1]
    %v304 = vsel %vm103, %v302, 0
    %306 = vmatprep.subr.bf16.mxu0 %v96
    %307 = vmatpush1.bf16.msra.mxu0 %v95
    %308 = vmatprep.subr.bf16.mxu0 %v98
    %309 = vmatpush1.bf16.msra.mxu0 %v97
    %310 = vmatprep.subr.bf16.mxu0 0
    %311 = vmatpush1.bf16.msra.mxu0 0
    %312 = vmatprep.subr.bf16.mxu0 0
    %313 = vmatpush1.bf16.msra.mxu0 0
    %314 = vmatprep.subr.bf16.mxu0 0
    %315 = vmatpush1.bf16.msra.mxu0 0
    %316 = vmatprep.subr.bf16.mxu0 0
    %317 = vmatpush1.bf16.msra.mxu0 0
    %318 = vmatprep.subr.bf16.mxu0 0
    %319 = vmatpush1.bf16.msra.mxu0 0
    %320 = vmatprep.subr.bf16.mxu0 0
    %321 = vmatpush1.bf16.msra.mxu0 0
    %322 = vmatprep.subr.bf16.mxu0 0
    %323 = vmatpush1.bf16.msra.mxu0 0
    %324 = vmatprep.subr.bf16.mxu0 0
    %325 = vmatpush1.bf16.msra.mxu0 0
    %326 = vmatprep.subr.bf16.mxu0 0
    %327 = vmatpush1.bf16.msra.mxu0 0
    %328 = vmatprep.subr.bf16.mxu0 0
    %329 = vmatpush1.bf16.msra.mxu0 0
    %330 = vmatprep.subr.bf16.mxu0 0
    %331 = vmatpush1.bf16.msra.mxu0 0
    %332 = vmatprep.subr.bf16.mxu0 0
    %333 = vmatpush1.bf16.msra.mxu0 0
    %334 = vmatprep.subr.bf16.mxu0 0
    %335 = vmatpush1.bf16.msra.mxu0 0
    %336 = vmatprep.subr.bf16.mxu0 0
    %337 = vmatpush1.bf16.msra.mxu0 0
    %338 = vmatprep.mubr.bf16.mxu0 0
    %339 = vmatmul.mubr.bf16.gmra.mrb[0].mxu0 %v304
    %v340 = vpop.f32.mrb[0].mxu0
    %v341 = vadd.f32 %v76, %v340
    %v342 = vpop.f32.mrb[0].mxu0
    %v343 = vadd.f32 %v80, %v342
    %v344 = vpop.f32.mrb[0].mxu0
    %v345 = vpop.f32.mrb[0].mxu0
    %346 = vdwg.mxu0
    %vm347 = vcmp.ge.f32.partialorder %v341, 0.0
    %vm348 = vcmp.ge.f32.partialorder %v343, 0.0
    %v349 = vmul.f32 %v150, %v341
    %v350 = vmul.f32 %v150, %v343
    %v351 = vsel %vm347, %v341, %v349
    %v352 = vsel %vm348, %v343, %v350
    %v353 = vpack.c.bf16 %v351, %v351
    %v354 = vpack.c.bf16 %v352, %v352
    %355 = vmatprep.subr.bf16.mxu0 0
    %356 = vmatpush1.bf16.msra.mxu0 %v227
    %357 = vmatprep.subr.bf16.mxu0 0
    %358 = vmatpush1.bf16.msra.mxu0 %v228
    %359 = vmatprep.subr.bf16.mxu0 0
    %360 = vmatpush1.bf16.msra.mxu0 %v229
    %361 = vmatprep.subr.bf16.mxu0 0
    %362 = vmatpush1.bf16.msra.mxu0 %v230
    %363 = vmatprep.subr.bf16.mxu0 0
    %364 = vmatpush1.bf16.msra.mxu0 %v231
    %365 = vmatprep.subr.bf16.mxu0 0
    %366 = vmatpush1.bf16.msra.mxu0 %v232
    %367 = vmatprep.subr.bf16.mxu0 0
    %368 = vmatpush1.bf16.msra.mxu0 %v233
    %369 = vmatprep.subr.bf16.mxu0 0
    %370 = vmatpush1.bf16.msra.mxu0 %v234
    %371 = vmatprep.subr.bf16.mxu0 0
    %372 = vmatpush1.bf16.msra.mxu0 %v235
    %373 = vmatprep.subr.bf16.mxu0 0
    %374 = vmatpush1.bf16.msra.mxu0 %v236
    %375 = vmatprep.subr.bf16.mxu0 0
    %376 = vmatpush1.bf16.msra.mxu0 %v237
    %377 = vmatprep.subr.bf16.mxu0 0
    %378 = vmatpush1.bf16.msra.mxu0 %v238
    %379 = vmatprep.subr.bf16.mxu0 0
    %380 = vmatpush1.bf16.msra.mxu0 %v239
    %381 = vmatprep.subr.bf16.mxu0 0
    %382 = vmatpush1.bf16.msra.mxu0 %v240
    %383 = vmatprep.subr.bf16.mxu0 0
    %384 = vmatpush1.bf16.msra.mxu0 %v241
    %385 = vmatprep.subr.bf16.mxu0 0
    %386 = vmatpush1.bf16.msra.mxu0 %v242
    %387 = vmatprep.mubr.bf16.mxu0 %v354
    %388 = vmatmul.mubr.bf16.gmra.mrb[0].mxu0 %v353
    %v389 = vpop.f32.mrb[0].mxu0
    %v390 = vadd.f32 %v161, %v389
    %v391 = vpop.f32.mrb[0].mxu0
    %v392 = vpop.f32.mrb[0].mxu0
    %v393 = vpop.f32.mrb[0].mxu0
    %394 = vdwg.mxu0
    %v395 = vpack.c.bf16 %v390, %v390
    %396 = vst.msk [vmem:[#allocation5] sm:$0x1] %vm300, %v395
    // Predicated region
    $region30: #{siamese_forward.1} parent=1 // pred_check
      _
    $region31: #{siamese_forward.1} parent=1 // pred_check_branch
      %398 = sbr.rel (0) target = $region33
    $region32: #{siamese_forward.1} parent=1 // pred_region
      %s400 = ssub.s32 16, 16
      %401 = vsyncadd [#allocation4], %s400
      %s403 = sshll.u32 [#allocation3], 4
      %s404 = int_to_ptr.vmem [resolvable:$true] %s403
      %406 = dma.vmem_to_hbm [thread:$0]  %s404, 16, %s7, [#allocation4]
    $region33: #{siamese_forward.1} parent=1 // pred_fallthru
      _
    // Predicated region
    $region34: #{siamese_forward.1} parent=1 // pred_check
      _
    $region35: #{siamese_forward.1} parent=1 // pred_check_branch
      %408 = sbr.rel (0) target = $region37
    $region36: #{siamese_forward.1} parent=1 // pred_region
      %s410 = ssub.s32 16, 16
      %411 = vsyncadd [#allocation6], %s410
      %s413 = sshll.u32 [#allocation5], 4
      %s414 = int_to_ptr.vmem [resolvable:$true] %s413
      %416 = dma.vmem_to_hbm [thread:$0]  %s414, 16, %s8, [#allocation6]
    $region37: #{siamese_forward.1} parent=1 // pred_fallthru
      _
    // Predicated region
    $region38: #{siamese_forward.1} parent=1 // pred_check
      _
    $region39: #{siamese_forward.1} parent=1 // pred_check_branch
      %418 = sbr.rel (0) target = $region41
    $region40: #{siamese_forward.1} parent=1 // pred_region
      %419 = dma.done [#allocation4], 16
    $region41: #{siamese_forward.1} parent=1 // pred_fallthru
      _
    // Predicated region
    $region42: #{siamese_forward.1} parent=1 // pred_check
      _
    $region43: #{siamese_forward.1} parent=1 // pred_check_branch
      %421 = sbr.rel (0) target = $region45
    $region44: #{siamese_forward.1} parent=1 // pred_region
      %422 = dma.done [#allocation6], 16
    $region45: #{siamese_forward.1} parent=1 // pred_fallthru
      _
    %423 = vsyncpa [#allocation4], 1
    %424 = vsyncpa [#allocation6], 1

</llo_original>
